<compile_context>
chip_gen: v5e
topology: v5e:2x2
jax: 0.10.0
libtpu: 0.0.40
codegen_flags: <defaults>
</compile_context>

<pallas_src>
import math

import jax
import jax.numpy as jnp
from jax.experimental import pallas as pl
from jax.experimental.pallas import tpu as pltpu


# ----------------------------------------------------------------------------
# Pallas kernel: lane-dense rotary embedding on (row_tile, lane_tile) blocks
# ----------------------------------------------------------------------------
def rope_kernel(x_ref, cos_ref, sin_e_ref, sin_o_ref, o_ref):
    # Tables are f32; compute in f32 regardless of x dtype, cast once on store.
    x = x_ref[...].astype(jnp.float32)          # (bt, lt)
    lt = x.shape[-1]
    # Pair partners via lane rotations (XLU slot, free next to the VPU work).
    # pltpu.roll matches jnp.roll: out[i] = x[(i - shift) mod lt].
    fwd = pltpu.roll(x, lt - 1, 1)              # out[i] = x[(i + 1) % lt]
    bwd = pltpu.roll(x, 1, 1)                   # out[i] = x[(i - 1) % lt]
    # sin_even is 0 on odd lanes and sin_odd is 0 on even lanes, so the roll
    # wrap-around values at lanes 0 / lt-1 are always multiplied by zero.
    out = x * cos_ref[...] + fwd * sin_e_ref[...] + bwd * sin_o_ref[...]
    o_ref[...] = out.astype(o_ref.dtype)


def _round_up(a, m):
    return (a + m - 1) // m * m


def _choose_tiles(rows, lc, itemsize, budget_bytes):
    """Pick (row_tile, lane_tile) so one x block stays under ~budget_bytes.

    Prefers full-width (lane-dense) rows; falls back to tiling the fused lane
    axis in even multiples of 128 for long rows so block bytes stay bounded.
    """
    sub = max(8, 32 // itemsize)                 # sublane packing: 8 f32, 16 bf16, 32 i8
    row_bytes = lc * itemsize
    if sub * row_bytes <= budget_bytes:
        # Full-width rows; tile only the row axis.
        bt = max(sub, (budget_bytes // row_bytes) // sub * sub)
        if bt >= rows:
            bt = rows                            # full extent (always a legal block dim)
            # v7x: 2 TensorCores per chip -- keep >= 2 grid steps when there is
            # enough data for the split to matter (no cost on single-TC v5e/v6e).
            if rows >= 2 * sub and rows * row_bytes > (1 << 20):
                bt = _round_up((rows + 1) // 2, sub)
        return bt, lc
    # Long rows: keep a thin row tile and tile the fused lane axis instead.
    bt = rows if rows < sub else sub
    lane_tile = max(128, (budget_bytes // (bt * itemsize)) // 128 * 128)
    if lane_tile >= lc:
        lane_tile = lc
    return bt, lane_tile


# ----------------------------------------------------------------------------
# Wrapper: builds f32 cos / sign-patterned sin tables, tiles rows and lanes
# ----------------------------------------------------------------------------
def rope_forward(x, base=10000.0, budget_bytes=4 * 1024 * 1024):
    assert x.ndim >= 3, "RoPE expects at least (batch, pos, ..., features)"
    orig_shape = x.shape
    pos_dim = x.shape[1]            # the module's single channel_dim
    feat = x.shape[-1]
    seq = x.shape[-2]               # axis the rotation table broadcasts against
    assert feat % 2 == 0, "feature dim must be even"
    k_max = feat // 2
    assert pos_dim == seq or pos_dim == 1, (
        "rotation table built from x.shape[1] must broadcast against x.shape[-2]")

    f32 = jnp.float32
    theta = 1.0 / (base ** (jnp.arange(k_max, dtype=f32) / k_max))
    angles = jnp.arange(pos_dim, dtype=f32)[:, None] * theta[None, :]        # (P, k_max)
    cos_t = jnp.cos(angles)
    sin_t = jnp.sin(angles)
    zeros = jnp.zeros_like(sin_t)
    cos_full = jnp.repeat(cos_t, 2, axis=-1)                                 # [ c, c, ...]
    sin_even = jnp.stack([-sin_t, zeros], axis=-1).reshape(pos_dim, feat)    # [-s, 0, ...]
    sin_odd = jnp.stack([zeros, sin_t], axis=-1).reshape(pos_dim, feat)      # [ 0,+s, ...]
    if pos_dim != seq:
        cos_full = jnp.broadcast_to(cos_full, (seq, feat))
        sin_even = jnp.broadcast_to(sin_even, (seq, feat))
        sin_odd = jnp.broadcast_to(sin_odd, (seq, feat))

    lc = seq * feat
    rows = math.prod(orig_shape[:-2])
    x2 = x.reshape(rows, lc)
    cos_row = cos_full.reshape(1, lc)                     # stays float32 on purpose
    sin_e_row = sin_even.reshape(1, lc)
    sin_o_row = sin_odd.reshape(1, lc)

    bt, lt = _choose_tiles(rows, lc, x.dtype.itemsize, budget_bytes)

    out = pl.pallas_call(
        rope_kernel,
        out_shape=jax.ShapeDtypeStruct((rows, lc), x.dtype),
        grid=(pl.cdiv(rows, bt), pl.cdiv(lc, lt)),
        in_specs=[
            pl.BlockSpec((bt, lt), lambda i, j: (i, j)),
            pl.BlockSpec((1, lt), lambda i, j: (0, j)),   # tables: resident along rows
            pl.BlockSpec((1, lt), lambda i, j: (0, j)),
            pl.BlockSpec((1, lt), lambda i, j: (0, j)),
        ],
        out_specs=pl.BlockSpec((bt, lt), lambda i, j: (i, j)),
        compiler_params=pltpu.CompilerParams(
            dimension_semantics=("parallel", "parallel"),
            vmem_limit_bytes=32 * 1024 * 1024,
        ),
    )(x2, cos_row, sin_e_row, sin_o_row)
    return out.reshape(orig_shape)


# ----------------------------------------------------------------------------
# Pure-JAX reference (mirrors the PyTorch complex-multiply formulation, f32)
# ----------------------------------------------------------------------------
def rope_ref(x, base=10000.0):
    xf = x.astype(jnp.float32)
    pos_dim = x.shape[1]
    feat = x.shape[-1]
    k_max = feat // 2
    theta = 1.0 / (base ** (jnp.arange(k_max, dtype=jnp.float32) / k_max))
    angles = jnp.arange(pos_dim, dtype=jnp.float32)[:, None] * theta[None, :]  # (P, k_max)
    cos, sin = jnp.cos(angles), jnp.sin(angles)
    xc = xf.reshape(*x.shape[:-1], k_max, 2)
    xr, xi = xc[..., 0], xc[..., 1]
    out_r = xr * cos - xi * sin
    out_i = xr * sin + xi * cos
    return jnp.stack([out_r, out_i], axis=-1).reshape(x.shape)


if __name__ == "__main__":
    key = jax.random.PRNGKey(0)
    k1, k2, k3, k4 = jax.random.split(key, 4)

    fwd = jax.jit(rope_forward)
    fwd_small_blocks = jax.jit(lambda t: rope_forward(t, budget_bytes=8 * 1024))

    # 1) 4-D usage as in MKLA: (b, h, w, c) feature map, h == w, rotation varies along w.
    x4 = jax.random.normal(k1, (2, 16, 16, 32), jnp.float32)
    out4 = fwd(x4)
    jax.block_until_ready(out4)
    assert out4.shape == x4.shape and out4.dtype == x4.dtype
    err4 = float(jnp.max(jnp.abs(out4 - rope_ref(x4))))
    assert err4 < 1e-5, err4

    # 2) 3-D usage: (b, n, c) sequence layout (standard rotary embedding).
    x3 = jax.random.normal(k2, (2, 64, 32), jnp.float32)
    out3 = fwd(x3)
    jax.block_until_ready(out3)
    assert out3.shape == x3.shape and out3.dtype == x3.dtype
    err3 = float(jnp.max(jnp.abs(out3 - rope_ref(x3))))
    assert err3 < 1e-5, err3

    # 3) bf16 input: tables/compute stay f32, only the store is bf16.
    xb = jax.random.normal(k3, (2, 16, 16, 32), jnp.float32).astype(jnp.bfloat16)
    outb = fwd(xb)
    jax.block_until_ready(outb)
    assert outb.shape == xb.shape and outb.dtype == xb.dtype
    errb = float(jnp.max(jnp.abs(outb.astype(jnp.float32) - rope_ref(xb))))
    assert errb < 6e-2, errb

    # 4) Force the lane-tiled path (tiny budget -> (8, 256) blocks, 4x2 grid).
    out4t = fwd_small_blocks(x4)
    jax.block_until_ready(out4t)
    err4t = float(jnp.max(jnp.abs(out4t - rope_ref(x4))))
    assert err4t < 1e-5, err4t

    # 5) >1 MiB single-block case: exercises the >=2-grid-step split heuristic.
    xs = jax.random.normal(k4, (2, 64, 64, 64), jnp.float32)
    outs = fwd(xs)
    jax.block_until_ready(outs)
    errs = float(jnp.max(jnp.abs(outs - rope_ref(xs))))
    assert errs < 1e-5, errs

    print("KERNEL_OK")
</pallas_src>

<mosaic_0001>
module attributes {stable_mosaic.version = 11 : i64} {
  func.func @rope_kernel(%arg0: i32, %arg1: i32, %arg2: memref<32x512xf32, #tpu.memory_space<vmem>>, %arg3: memref<1x512xf32, #tpu.memory_space<vmem>>, %arg4: memref<1x512xf32, #tpu.memory_space<vmem>>, %arg5: memref<1x512xf32, #tpu.memory_space<vmem>>, %arg6: memref<32x512xf32, #tpu.memory_space<vmem>>) attributes {dimension_semantics = [#tpu.dimension_semantics<parallel>, #tpu.dimension_semantics<parallel>], iteration_bounds = array<i64: 1, 1>, scalar_prefetch = 0 : i64, scratch_operands = 0 : i64, tpu.core_type = #tpu.core_type<tc>, window_params = [{transform_indices = @transform_0, window_bounds = array<i64: 32, 512>}, {transform_indices = @transform_1, window_bounds = array<i64: 1, 512>}, {transform_indices = @transform_2, window_bounds = array<i64: 1, 512>}, {transform_indices = @transform_3, window_bounds = array<i64: 1, 512>}, {transform_indices = @transform_4, window_bounds = array<i64: 32, 512>}]} {
    %c0 = arith.constant 0 : index
    %c0_0 = arith.constant 0 : index
    %0 = vector.load %arg2[%c0, %c0_0] : memref<32x512xf32, #tpu.memory_space<vmem>>, vector<32x512xf32>
    %c511_i32 = arith.constant 511 : i32
    %1 = tpu.dynamic_rotate %0 by %c511_i32 dim 1 : vector<32x512xf32>, i32 -> vector<32x512xf32>
    %c1_i32 = arith.constant 1 : i32
    %2 = tpu.dynamic_rotate %0 by %c1_i32 dim 1 : vector<32x512xf32>, i32 -> vector<32x512xf32>
    %c0_1 = arith.constant 0 : index
    %c0_2 = arith.constant 0 : index
    %3 = vector.load %arg3[%c0_1, %c0_2] : memref<1x512xf32, #tpu.memory_space<vmem>>, vector<1x512xf32>
    %4 = vector.broadcast %3 : vector<1x512xf32> to vector<32x512xf32>
    %5 = arith.mulf %0, %4 : vector<32x512xf32>
    %c0_3 = arith.constant 0 : index
    %c0_4 = arith.constant 0 : index
    %6 = vector.load %arg4[%c0_3, %c0_4] : memref<1x512xf32, #tpu.memory_space<vmem>>, vector<1x512xf32>
    %7 = vector.broadcast %6 : vector<1x512xf32> to vector<32x512xf32>
    %8 = arith.mulf %1, %7 : vector<32x512xf32>
    %9 = arith.addf %5, %8 : vector<32x512xf32>
    %c0_5 = arith.constant 0 : index
    %c0_6 = arith.constant 0 : index
    %10 = vector.load %arg5[%c0_5, %c0_6] : memref<1x512xf32, #tpu.memory_space<vmem>>, vector<1x512xf32>
    %11 = vector.broadcast %10 : vector<1x512xf32> to vector<32x512xf32>
    %12 = arith.mulf %2, %11 : vector<32x512xf32>
    %13 = arith.addf %9, %12 : vector<32x512xf32>
    %c0_7 = arith.constant 0 : index
    %c0_8 = arith.constant 0 : index
    %14 = vector.load %arg6[%c0_7, %c0_8] : memref<32x512xf32, #tpu.memory_space<vmem>>, vector<32x512xf32>
    tpu.vector_store %arg6[%c0_7, %c0_8], %13 {strides = array<i32>} : memref<32x512xf32, #tpu.memory_space<vmem>>, vector<32x512xf32>,
    return
  }
  func.func @transform_0(%arg0: i32, %arg1: i32) -> (i32, i32) {
    %c0_i32 = arith.constant 0 : i32
    return %arg0, %arg1 : i32, i32
  }
  func.func @transform_1(%arg0: i32, %arg1: i32) -> (i32, i32) {
    %c0_i32 = arith.constant 0 : i32
    %c0_i32_0 = arith.constant 0 : i32
    return %c0_i32, %arg1 : i32, i32
  }
  func.func @transform_2(%arg0: i32, %arg1: i32) -> (i32, i32) {
    %c0_i32 = arith.constant 0 : i32
    %c0_i32_0 = arith.constant 0 : i32
    return %c0_i32, %arg1 : i32, i32
  }
  func.func @transform_3(%arg0: i32, %arg1: i32) -> (i32, i32) {
    %c0_i32 = arith.constant 0 : i32
    %c0_i32_0 = arith.constant 0 : i32
    return %c0_i32, %arg1 : i32, i32
  }
  func.func @transform_4(%arg0: i32, %arg1: i32) -> (i32, i32) {
    %c0_i32 = arith.constant 0 : i32
    return %arg0, %arg1 : i32, i32
  }
}

</mosaic_0001>

<llo_original>
// kernel: rope_forward.1
$region0: #{rope_forward.1}
  #allocation0 [shape = 'u32[]', space=smem, size = 0x4, offset = 0x4, fixed_abs, tag = 'smem constant byte address 0x4 - core index']
  #allocation1 [shape = 'u32[72,128]{1,0:T(1,128)}', space=vmem, size = 0x9000, scoped, tag = 'internal scratch']
  %s0 = inlined_call_operand.vmem [shape: f32[32,512], index: 0, kind: input, shape index: {}]
  %s1 = inlined_call_operand.vmem [shape: f32[1,512], index: 1, kind: input, shape index: {}]
  %s2 = inlined_call_operand.vmem [shape: f32[1,512], index: 2, kind: input, shape index: {}]
  %s3 = inlined_call_operand.vmem [shape: f32[1,512], index: 3, kind: input, shape index: {}]
  %s4 = inlined_call_operand.vmem [shape: f32[32,512], index: 4, kind: output, shape index: {}]
  %s5 = sld [smem:[#allocation0]]
  $region26: #{rope_forward.1} parent=0
    _
  %s7 = ssub.s32 1, %s5
  %s8 = scalar_select 0, %s7, %s5
  // Predicated region
  $region2: #{rope_forward.1} parent=0 // pred_check
    _
  $region3: #{rope_forward.1} parent=0 // pred_check_branch
    %10 = sbr.rel (0) target = $region5
  $region4: #{rope_forward.1} parent=0 // pred_region
    _
  $region5: #{rope_forward.1} parent=0 // pred_fallthru
    _
  // Predicated region
  $region6: #{rope_forward.1} parent=0 // pred_check
    _
  $region7: #{rope_forward.1} parent=0 // pred_check_branch
    %12 = sbr.rel (0) target = $region9
  $region8: #{rope_forward.1} parent=0 // pred_region
    _
  $region9: #{rope_forward.1} parent=0 // pred_fallthru
    _
  // Predicated region
  $region10: #{rope_forward.1} parent=0 // pred_check
    _
  $region11: #{rope_forward.1} parent=0 // pred_check_branch
    %14 = sbr.rel (0) target = $region13
  $region12: #{rope_forward.1} parent=0 // pred_region
    _
  $region13: #{rope_forward.1} parent=0 // pred_fallthru
    _
  // Predicated region
  $region14: #{rope_forward.1} parent=0 // pred_check
    _
  $region15: #{rope_forward.1} parent=0 // pred_check_branch
    %16 = sbr.rel (0) target = $region17
  $region16: #{rope_forward.1} parent=0 // pred_region
    _
  $region17: #{rope_forward.1} parent=0 // pred_fallthru
    _
  %v17 = vld [vmem:[%s0] sm:$0xff]
  %v18 = vld [vmem:[%s0 + $0x8] sm:$0xff]
  %v19 = vld [vmem:[%s0 + $0x10] sm:$0xff]
  %v20 = vld [vmem:[%s0 + $0x18] sm:$0xff]
  %v21 = vld [vmem:[%s0 + $0x20] sm:$0xff]
  %v22 = vld [vmem:[%s0 + $0x28] sm:$0xff]
  %v23 = vld [vmem:[%s0 + $0x30] sm:$0xff]
  %v24 = vld [vmem:[%s0 + $0x38] sm:$0xff]
  %v25 = vld [vmem:[%s0 + $0x40] sm:$0xff]
  %v26 = vld [vmem:[%s0 + $0x48] sm:$0xff]
  %v27 = vld [vmem:[%s0 + $0x50] sm:$0xff]
  %v28 = vld [vmem:[%s0 + $0x58] sm:$0xff]
  %v29 = vld [vmem:[%s0 + $0x60] sm:$0xff]
  %v30 = vld [vmem:[%s0 + $0x68] sm:$0xff]
  %v31 = vld [vmem:[%s0 + $0x70] sm:$0xff]
  %v32 = vld [vmem:[%s0 + $0x78] sm:$0xff]
  %33 = vrot.lane.b32.xlu0 %v17, 127
  %v34 = vpop.permute.xlu0 %33
  %35 = vrot.lane.b32.xlu0 %v21, 127
  %v36 = vpop.permute.xlu0 %35
  %37 = vrot.lane.b32.xlu0 %v25, 127
  %v38 = vpop.permute.xlu0 %37
  %39 = vrot.lane.b32.xlu0 %v29, 127
  %v40 = vpop.permute.xlu0 %39
  %41 = vrot.lane.b32.xlu0 %v18, 127
  %v42 = vpop.permute.xlu0 %41
  %43 = vrot.lane.b32.xlu0 %v22, 127
  %v44 = vpop.permute.xlu0 %43
  %45 = vrot.lane.b32.xlu0 %v26, 127
  %v46 = vpop.permute.xlu0 %45
  %47 = vrot.lane.b32.xlu0 %v30, 127
  %v48 = vpop.permute.xlu0 %47
  %49 = vrot.lane.b32.xlu0 %v19, 127
  %v50 = vpop.permute.xlu0 %49
  %51 = vrot.lane.b32.xlu0 %v23, 127
  %v52 = vpop.permute.xlu0 %51
  %53 = vrot.lane.b32.xlu0 %v27, 127
  %v54 = vpop.permute.xlu0 %53
  %55 = vrot.lane.b32.xlu0 %v31, 127
  %v56 = vpop.permute.xlu0 %55
  %57 = vrot.lane.b32.xlu0 %v20, 127
  %v58 = vpop.permute.xlu0 %57
  %59 = vrot.lane.b32.xlu0 %v24, 127
  %v60 = vpop.permute.xlu0 %59
  %61 = vrot.lane.b32.xlu0 %v28, 127
  %v62 = vpop.permute.xlu0 %61
  %63 = vrot.lane.b32.xlu0 %v32, 127
  %v64 = vpop.permute.xlu0 %63
  %v65 = vlaneseq
  %v66 = vand.u32 %v65, 127
  %vm67 = vcmp.lt.s32.totalorder %v66, 127
  %v68 = vsel %vm67, %v50, %v58
  %v69 = vsel %vm67, %v52, %v60
  %v70 = vsel %vm67, %v54, %v62
  %v71 = vsel %vm67, %v56, %v64
  %v72 = vsel %vm67, %v42, %v50
  %v73 = vsel %vm67, %v44, %v52
  %v74 = vsel %vm67, %v46, %v54
  %v75 = vsel %vm67, %v48, %v56
  %v76 = vsel %vm67, %v34, %v42
  %v77 = vsel %vm67, %v36, %v44
  %v78 = vsel %vm67, %v38, %v46
  %v79 = vsel %vm67, %v40, %v48
  %v80 = vsel %vm67, %v58, %v34
  %v81 = vsel %vm67, %v60, %v36
  %v82 = vsel %vm67, %v62, %v38
  %v83 = vsel %vm67, %v64, %v40
  %84 = vrot.lane.b32.xlu0 %v17, 1
  %v85 = vpop.permute.xlu0 %84
  %86 = vrot.lane.b32.xlu0 %v21, 1
  %v87 = vpop.permute.xlu0 %86
  %88 = vrot.lane.b32.xlu0 %v25, 1
  %v89 = vpop.permute.xlu0 %88
  %90 = vrot.lane.b32.xlu0 %v29, 1
  %v91 = vpop.permute.xlu0 %90
  %92 = vrot.lane.b32.xlu0 %v18, 1
  %v93 = vpop.permute.xlu0 %92
  %94 = vrot.lane.b32.xlu0 %v22, 1
  %v95 = vpop.permute.xlu0 %94
  %96 = vrot.lane.b32.xlu0 %v26, 1
  %v97 = vpop.permute.xlu0 %96
  %98 = vrot.lane.b32.xlu0 %v30, 1
  %v99 = vpop.permute.xlu0 %98
  %100 = vrot.lane.b32.xlu0 %v19, 1
  %v101 = vpop.permute.xlu0 %100
  %102 = vrot.lane.b32.xlu0 %v23, 1
  %v103 = vpop.permute.xlu0 %102
  %104 = vrot.lane.b32.xlu0 %v27, 1
  %v105 = vpop.permute.xlu0 %104
  %106 = vrot.lane.b32.xlu0 %v31, 1
  %v107 = vpop.permute.xlu0 %106
  %108 = vrot.lane.b32.xlu0 %v20, 1
  %v109 = vpop.permute.xlu0 %108
  %110 = vrot.lane.b32.xlu0 %v24, 1
  %v111 = vpop.permute.xlu0 %110
  %112 = vrot.lane.b32.xlu0 %v28, 1
  %v113 = vpop.permute.xlu0 %112
  %114 = vrot.lane.b32.xlu0 %v32, 1
  %v115 = vpop.permute.xlu0 %114
  %vm116 = vcmp.lt.s32.totalorder %v66, 1
  %v117 = vsel %vm116, %v101, %v109
  %v118 = vsel %vm116, %v103, %v111
  %v119 = vsel %vm116, %v105, %v113
  %v120 = vsel %vm116, %v107, %v115
  %v121 = vsel %vm116, %v93, %v101
  %v122 = vsel %vm116, %v95, %v103
  %v123 = vsel %vm116, %v97, %v105
  %v124 = vsel %vm116, %v99, %v107
  %v125 = vsel %vm116, %v85, %v93
  %v126 = vsel %vm116, %v87, %v95
  %v127 = vsel %vm116, %v89, %v97
  %v128 = vsel %vm116, %v91, %v99
  %v129 = vsel %vm116, %v109, %v85
  %v130 = vsel %vm116, %v111, %v87
  %v131 = vsel %vm116, %v113, %v89
  %v132 = vsel %vm116, %v115, %v91
  %v133 = vld [vmem:[%s1] sm:$0xf]
  %v135 = vperm.slane %v133, 0
  %v136 = vperm.slane %v133, 1
  %v137 = vperm.slane %v133, 2
  %v138 = vperm.slane %v133, 3
  %v143 = vmul.f32 %v17, %v135
  %v144 = vmul.f32 %v18, %v136
  %v145 = vmul.f32 %v19, %v137
  %v146 = vmul.f32 %v20, %v138
  %v147 = vmul.f32 %v21, %v135
  %v148 = vmul.f32 %v22, %v136
  %v149 = vmul.f32 %v23, %v137
  %v150 = vmul.f32 %v24, %v138
  %v151 = vmul.f32 %v25, %v135
  %v152 = vmul.f32 %v26, %v136
  %v153 = vmul.f32 %v27, %v137
  %v154 = vmul.f32 %v28, %v138
  %v155 = vmul.f32 %v29, %v135
  %v156 = vmul.f32 %v30, %v136
  %v157 = vmul.f32 %v31, %v137
  %v158 = vmul.f32 %v32, %v138
  %v159 = vld [vmem:[%s2] sm:$0xf]
  %v161 = vperm.slane %v159, 0
  %v162 = vperm.slane %v159, 1
  %v163 = vperm.slane %v159, 2
  %v164 = vperm.slane %v159, 3
  %v169 = vmul.f32 %v76, %v161
  %v170 = vmul.f32 %v72, %v162
  %v171 = vmul.f32 %v68, %v163
  %v172 = vmul.f32 %v80, %v164
  %v173 = vmul.f32 %v77, %v161
  %v174 = vmul.f32 %v73, %v162
  %v175 = vmul.f32 %v69, %v163
  %v176 = vmul.f32 %v81, %v164
  %v177 = vmul.f32 %v78, %v161
  %v178 = vmul.f32 %v74, %v162
  %v179 = vmul.f32 %v70, %v163
  %v180 = vmul.f32 %v82, %v164
  %v181 = vmul.f32 %v79, %v161
  %v182 = vmul.f32 %v75, %v162
  %v183 = vmul.f32 %v71, %v163
  %v184 = vmul.f32 %v83, %v164
  %v185 = vadd.f32 %v143, %v169
  %v186 = vadd.f32 %v144, %v170
  %v187 = vadd.f32 %v145, %v171
  %v188 = vadd.f32 %v146, %v172
  %v189 = vadd.f32 %v147, %v173
  %v190 = vadd.f32 %v148, %v174
  %v191 = vadd.f32 %v149, %v175
  %v192 = vadd.f32 %v150, %v176
  %v193 = vadd.f32 %v151, %v177
  %v194 = vadd.f32 %v152, %v178
  %v195 = vadd.f32 %v153, %v179
  %v196 = vadd.f32 %v154, %v180
  %v197 = vadd.f32 %v155, %v181
  %v198 = vadd.f32 %v156, %v182
  %v199 = vadd.f32 %v157, %v183
  %v200 = vadd.f32 %v158, %v184
  %v201 = vld [vmem:[%s3] sm:$0xf]
  %v203 = vperm.slane %v201, 0
  %v204 = vperm.slane %v201, 1
  %v205 = vperm.slane %v201, 2
  %v206 = vperm.slane %v201, 3
  %v211 = vmul.f32 %v129, %v203
  %v212 = vmul.f32 %v125, %v204
  %v213 = vmul.f32 %v121, %v205
  %v214 = vmul.f32 %v117, %v206
  %v215 = vmul.f32 %v130, %v203
  %v216 = vmul.f32 %v126, %v204
  %v217 = vmul.f32 %v122, %v205
  %v218 = vmul.f32 %v118, %v206
  %v219 = vmul.f32 %v131, %v203
  %v220 = vmul.f32 %v127, %v204
  %v221 = vmul.f32 %v123, %v205
  %v222 = vmul.f32 %v119, %v206
  %v223 = vmul.f32 %v132, %v203
  %v224 = vmul.f32 %v128, %v204
  %v225 = vmul.f32 %v124, %v205
  %v226 = vmul.f32 %v120, %v206
  %v227 = vadd.f32 %v185, %v211
  %v228 = vadd.f32 %v186, %v212
  %v229 = vadd.f32 %v187, %v213
  %v230 = vadd.f32 %v188, %v214
  %v231 = vadd.f32 %v189, %v215
  %v232 = vadd.f32 %v190, %v216
  %v233 = vadd.f32 %v191, %v217
  %v234 = vadd.f32 %v192, %v218
  %v235 = vadd.f32 %v193, %v219
  %v236 = vadd.f32 %v194, %v220
  %v237 = vadd.f32 %v195, %v221
  %v238 = vadd.f32 %v196, %v222
  %v239 = vadd.f32 %v197, %v223
  %v240 = vadd.f32 %v198, %v224
  %v241 = vadd.f32 %v199, %v225
  %v242 = vadd.f32 %v200, %v226
  %243 = vst [vmem:[%s4] sm:$0xff] %v227
  %244 = vst [vmem:[%s4 + $0x8] sm:$0xff] %v228
  %245 = vst [vmem:[%s4 + $0x10] sm:$0xff] %v229
  %246 = vst [vmem:[%s4 + $0x18] sm:$0xff] %v230
  %247 = vst [vmem:[%s4 + $0x20] sm:$0xff] %v231
  %248 = vst [vmem:[%s4 + $0x28] sm:$0xff] %v232
  %249 = vst [vmem:[%s4 + $0x30] sm:$0xff] %v233
  %250 = vst [vmem:[%s4 + $0x38] sm:$0xff] %v234
  %251 = vst [vmem:[%s4 + $0x40] sm:$0xff] %v235
  %252 = vst [vmem:[%s4 + $0x48] sm:$0xff] %v236
  %253 = vst [vmem:[%s4 + $0x50] sm:$0xff] %v237
  %254 = vst [vmem:[%s4 + $0x58] sm:$0xff] %v238
  %255 = vst [vmem:[%s4 + $0x60] sm:$0xff] %v239
  %256 = vst [vmem:[%s4 + $0x68] sm:$0xff] %v240
  %257 = vst [vmem:[%s4 + $0x70] sm:$0xff] %v241
  %258 = vst [vmem:[%s4 + $0x78] sm:$0xff] %v242
  // Predicated region
  $region18: #{rope_forward.1} parent=0 // pred_check
    _
  $region19: #{rope_forward.1} parent=0 // pred_check_branch
    %260 = sbr.rel (0) target = $region21
  $region20: #{rope_forward.1} parent=0 // pred_region
    _
  $region21: #{rope_forward.1} parent=0 // pred_fallthru
    _
  // Predicated region
  $region22: #{rope_forward.1} parent=0 // pred_check
    _
  $region23: #{rope_forward.1} parent=0 // pred_check_branch
    %262 = sbr.rel (0) target = $region25
  $region24: #{rope_forward.1} parent=0 // pred_region
    _
  $region25: #{rope_forward.1} parent=0 // pred_fallthru
    _

</llo_original>
